<compile_context>
chip_gen: v7x
topology: tpu7x:2x2x1
jax: 0.10.0
libtpu: 0.0.40
codegen_flags: <defaults>
</compile_context>

<pallas_src>
import jax
import jax.numpy as jnp
from jax.experimental import pallas as pl
from jax.experimental.pallas import tpu as pltpu


# ---------------------------------------------------------------------------
# Kernel
# ---------------------------------------------------------------------------
def _mlp_kernel(x_ref, w1_ref, b1_ref, w2_ref, b2_ref, w3_ref, b3_ref, o_ref):
    cd = w1_ref.dtype  # compute dtype for MXU operands (bf16 by default)

    # Layer 1: (TB, E) @ (E, 32) -> f32 accum; bias + ReLU on the VPU in f32.
    h1 = jnp.dot(x_ref[...], w1_ref[...], preferred_element_type=jnp.float32)
    h1 = jnp.maximum(h1 + b1_ref[...], 0.0)

    # Layer 2: (TB, 32) @ (32, 16) -> f32 accum.
    h2 = jnp.dot(h1.astype(cd), w2_ref[...], preferred_element_type=jnp.float32)
    h2 = jnp.maximum(h2 + b2_ref[...], 0.0)

    # Layer 3: (TB, 16) @ (16, 3) -> f32 accum.
    out = jnp.dot(h2.astype(cd), w3_ref[...], preferred_element_type=jnp.float32)
    o_ref[...] = (out + b3_ref[...]).astype(o_ref.dtype)


# ---------------------------------------------------------------------------
# Wrapper
# ---------------------------------------------------------------------------
def _round_up(n, m):
    return (n + m - 1) // m * m


def _choose_tile_b(B, E, itemsize, align, *, max_tile=1024, x_budget_bytes=16 << 20):
    """Largest batch tile (multiple of `align`) whose double-buffered x block
    stays under `x_budget_bytes`, capped at `max_tile` (safe on v5e/v6e/v7x)."""
    cap = max(align, (x_budget_bytes // (2 * E * itemsize)) // align * align)
    tile = min(max_tile, cap, _round_up(B, align))
    return max(align, (tile // align) * align)


def neural_net_forward(x, params, *, tile_b=None, compute_dtype=jnp.bfloat16):
    """x: (B, E) float32.  params: dict with w{1,2,3} (in,out) and b{1,2,3} (1,out)."""
    B, E = x.shape
    out_dtype = x.dtype
    itemsize = jnp.dtype(compute_dtype).itemsize
    align = 16 if itemsize == 2 else 8  # sublane alignment for packed dtypes

    if tile_b is None:
        tile_b = _choose_tile_b(B, E, itemsize, align)
    assert tile_b % align == 0, f"tile_b must be a multiple of {align}"

    num_tiles = pl.cdiv(B, tile_b)
    b_pad = num_tiles * tile_b

    # Cast the streamed operands to the compute dtype; biases stay f32.
    xc = x.astype(compute_dtype)
    if b_pad != B:
        xc = jnp.pad(xc, ((0, b_pad - B), (0, 0)))
    w1 = params["w1"].astype(compute_dtype)
    w2 = params["w2"].astype(compute_dtype)
    w3 = params["w3"].astype(compute_dtype)
    b1 = params["b1"].astype(jnp.float32)
    b2 = params["b2"].astype(jnp.float32)
    b3 = params["b3"].astype(jnp.float32)

    def rep(arr):
        # weights/biases are replicated across the batch grid axis
        return pl.BlockSpec(arr.shape, lambda i: (0, 0))

    # VMEM footprint estimate (double-buffered x & out blocks, lane-padded
    # f32 intermediates, replicated weights) -> explicit scoped-VMEM limit
    # with headroom below v7x's 64 MiB physical capacity.
    vmem_est = (
        2 * tile_b * E * itemsize          # x block, double-buffered
        + 2 * tile_b * 128 * 4             # output block (lane-padded f32)
        + 2 * tile_b * 128 * 4             # h1/h2 f32 intermediates (lane-padded)
        + 2 * (E + 32 + 16) * 128 * itemsize  # weights (lane-padded, double-buffered)
        + 3 * 8 * 128 * 4                  # biases (padded)
    )
    vmem_limit = int(min(48 << 20, max(16 << 20, 2 * vmem_est)))

    flops = 2 * b_pad * (E * 32 + 32 * 16 + 16 * 3)
    bytes_accessed = (
        b_pad * E * itemsize + b_pad * 3 * 4
        + (E * 32 + 32 * 16 + 16 * 3) * itemsize
        + (32 + 16 + 3) * 4
    )

    out_padded = pl.pallas_call(
        _mlp_kernel,
        out_shape=jax.ShapeDtypeStruct((b_pad, 3), out_dtype),
        grid_spec=pltpu.PrefetchScalarGridSpec(
            num_scalar_prefetch=0,
            grid=(num_tiles,),
            in_specs=[
                pl.BlockSpec((tile_b, E), lambda i: (i, 0)),
                rep(w1), rep(b1),
                rep(w2), rep(b2),
                rep(w3), rep(b3),
            ],
            out_specs=pl.BlockSpec((tile_b, 3), lambda i: (i, 0)),
        ),
        compiler_params=pltpu.CompilerParams(
            dimension_semantics=("parallel",),
            vmem_limit_bytes=vmem_limit,
        ),
        cost_estimate=pl.CostEstimate(
            flops=flops, transcendentals=0, bytes_accessed=bytes_accessed),
    )(xc, w1, b1, w2, b2, w3, b3)

    return out_padded[:B] if b_pad != B else out_padded


# ---------------------------------------------------------------------------
# Params + reference
# ---------------------------------------------------------------------------
def init_params(key, embedding):
    """Deterministic init matching nn.Linear default (U(-1/sqrt(in), 1/sqrt(in)))."""
    dims = [(embedding, 32), (32, 16), (16, 3)]
    params = {}
    for idx, (fan_in, fan_out) in enumerate(dims, start=1):
        key, kw, kb = jax.random.split(key, 3)
        bound = 1.0 / jnp.sqrt(float(fan_in))
        # stored already transposed: (in, out)
        params[f"w{idx}"] = jax.random.uniform(
            kw, (fan_in, fan_out), jnp.float32, -bound, bound)
        params[f"b{idx}"] = jax.random.uniform(
            kb, (1, fan_out), jnp.float32, -bound, bound)
    return params


def reference_forward(x, params, compute_dtype=jnp.bfloat16):
    """Mirrors the kernel's compute path (bf16 MXU operands, f32 accumulation)."""
    f32 = jnp.float32
    cast = lambda a: a.astype(compute_dtype).astype(f32)
    h1 = jnp.maximum(cast(x) @ cast(params["w1"]) + params["b1"], 0.0)
    h2 = jnp.maximum(cast(h1) @ cast(params["w2"]) + params["b2"], 0.0)
    return cast(h2) @ cast(params["w3"]) + params["b3"]


# ---------------------------------------------------------------------------
# Self-test
# ---------------------------------------------------------------------------
if __name__ == "__main__":
    EMBEDDING = 64

    key = jax.random.PRNGKey(0)
    key, kx1, kx2 = jax.random.split(key, 3)
    params = init_params(key, EMBEDDING)

    # Case 1: small batch, single-tile grid.
    x1 = jax.random.normal(kx1, (8, EMBEDDING), jnp.float32)
    out1 = jax.block_until_ready(neural_net_forward(x1, params))
    ref1 = reference_forward(x1, params)
    assert out1.shape == (8, 3)
    assert jnp.allclose(out1, ref1, atol=1e-4, rtol=1e-3)

    # Case 2: ragged batch (not a tile multiple) with a multi-step pipelined grid.
    x2 = jax.random.normal(kx2, (260, EMBEDDING), jnp.float32)
    out2 = jax.block_until_ready(neural_net_forward(x2, params, tile_b=64))
    ref2 = reference_forward(x2, params)
    assert out2.shape == (260, 3)
    assert jnp.allclose(out2, ref2, atol=1e-4, rtol=1e-3)

    print("KERNEL_OK")
</pallas_src>

<mosaic_0001>
module attributes {stable_mosaic.version = 11 : i64} {
  func.func @_mlp_kernel(%arg0: i32, %arg1: memref<16x64xbf16, #tpu.memory_space<vmem>>, %arg2: memref<64x32xbf16, #tpu.memory_space<vmem>>, %arg3: memref<1x32xf32, #tpu.memory_space<vmem>>, %arg4: memref<32x16xbf16, #tpu.memory_space<vmem>>, %arg5: memref<1x16xf32, #tpu.memory_space<vmem>>, %arg6: memref<16x3xbf16, #tpu.memory_space<vmem>>, %arg7: memref<1x3xf32, #tpu.memory_space<vmem>>, %arg8: memref<16x3xf32, #tpu.memory_space<vmem>>) attributes {dimension_semantics = [#tpu.dimension_semantics<parallel>], iteration_bounds = array<i64: 1>, scalar_prefetch = 0 : i64, scratch_operands = 0 : i64, tpu.core_type = #tpu.core_type<tc>, window_params = [{transform_indices = @transform_0, window_bounds = array<i64: 16, 64>}, {pipeline_mode = #tpu.pipeline_mode<synchronous>, transform_indices = @transform_1, window_bounds = array<i64: 64, 32>}, {pipeline_mode = #tpu.pipeline_mode<synchronous>, transform_indices = @transform_2, window_bounds = array<i64: 1, 32>}, {pipeline_mode = #tpu.pipeline_mode<synchronous>, transform_indices = @transform_3, window_bounds = array<i64: 32, 16>}, {pipeline_mode = #tpu.pipeline_mode<synchronous>, transform_indices = @transform_4, window_bounds = array<i64: 1, 16>}, {pipeline_mode = #tpu.pipeline_mode<synchronous>, transform_indices = @transform_5, window_bounds = array<i64: 16, 3>}, {pipeline_mode = #tpu.pipeline_mode<synchronous>, transform_indices = @transform_6, window_bounds = array<i64: 1, 3>}, {transform_indices = @transform_7, window_bounds = array<i64: 16, 3>}]} {
    %c0 = arith.constant 0 : index
    %c0_0 = arith.constant 0 : index
    %0 = vector.load %arg1[%c0, %c0_0] : memref<16x64xbf16, #tpu.memory_space<vmem>>, vector<16x64xbf16>
    %c0_1 = arith.constant 0 : index
    %c0_2 = arith.constant 0 : index
    %1 = vector.load %arg2[%c0_1, %c0_2] : memref<64x32xbf16, #tpu.memory_space<vmem>>, vector<64x32xbf16>
    %cst = arith.constant dense<0.000000e+00> : vector<16x32xf32>
    %2 = tpu.matmul %0, %1, %cst {dimension_numbers = #tpu.dot_dimension_numbers<[1], [0], [0], [1], [0, 0, 1, 1], [], []>} : vector<16x64xbf16>, vector<64x32xbf16>, vector<16x32xf32> -> vector<16x32xf32>
    %c0_3 = arith.constant 0 : index
    %c0_4 = arith.constant 0 : index
    %3 = vector.load %arg3[%c0_3, %c0_4] : memref<1x32xf32, #tpu.memory_space<vmem>>, vector<1x32xf32>
    %4 = vector.broadcast %3 : vector<1x32xf32> to vector<16x32xf32>
    %5 = arith.addf %2, %4 : vector<16x32xf32>
    %cst_5 = arith.constant 0.000000e+00 : f32
    %6 = vector.broadcast %cst_5 : f32 to vector<16x32xf32>
    %7 = arith.maximumf %5, %6 : vector<16x32xf32>
    %8 = arith.truncf %7 : vector<16x32xf32> to vector<16x32xbf16>
    %c0_6 = arith.constant 0 : index
    %c0_7 = arith.constant 0 : index
    %9 = vector.load %arg4[%c0_6, %c0_7] : memref<32x16xbf16, #tpu.memory_space<vmem>>, vector<32x16xbf16>
    %cst_8 = arith.constant dense<0.000000e+00> : vector<16x16xf32>
    %10 = tpu.matmul %8, %9, %cst_8 {dimension_numbers = #tpu.dot_dimension_numbers<[1], [0], [0], [1], [0, 0, 1, 1], [], []>} : vector<16x32xbf16>, vector<32x16xbf16>, vector<16x16xf32> -> vector<16x16xf32>
    %c0_9 = arith.constant 0 : index
    %c0_10 = arith.constant 0 : index
    %11 = vector.load %arg5[%c0_9, %c0_10] : memref<1x16xf32, #tpu.memory_space<vmem>>, vector<1x16xf32>
    %12 = vector.broadcast %11 : vector<1x16xf32> to vector<16x16xf32>
    %13 = arith.addf %10, %12 : vector<16x16xf32>
    %cst_11 = arith.constant 0.000000e+00 : f32
    %14 = vector.broadcast %cst_11 : f32 to vector<16x16xf32>
    %15 = arith.maximumf %13, %14 : vector<16x16xf32>
    %16 = arith.truncf %15 : vector<16x16xf32> to vector<16x16xbf16>
    %c0_12 = arith.constant 0 : index
    %c0_13 = arith.constant 0 : index
    %17 = vector.load %arg6[%c0_12, %c0_13] : memref<16x3xbf16, #tpu.memory_space<vmem>>, vector<16x3xbf16>
    %cst_14 = arith.constant dense<0.000000e+00> : vector<16x3xf32>
    %18 = tpu.matmul %16, %17, %cst_14 {dimension_numbers = #tpu.dot_dimension_numbers<[1], [0], [0], [1], [0, 0, 1, 1], [], []>} : vector<16x16xbf16>, vector<16x3xbf16>, vector<16x3xf32> -> vector<16x3xf32>
    %c0_15 = arith.constant 0 : index
    %c0_16 = arith.constant 0 : index
    %19 = vector.load %arg7[%c0_15, %c0_16] : memref<1x3xf32, #tpu.memory_space<vmem>>, vector<1x3xf32>
    %20 = vector.broadcast %19 : vector<1x3xf32> to vector<16x3xf32>
    %21 = arith.addf %18, %20 : vector<16x3xf32>
    %c0_17 = arith.constant 0 : index
    %c0_18 = arith.constant 0 : index
    %22 = vector.load %arg8[%c0_17, %c0_18] : memref<16x3xf32, #tpu.memory_space<vmem>>, vector<16x3xf32>
    tpu.vector_store %arg8[%c0_17, %c0_18], %21 {strides = array<i32>} : memref<16x3xf32, #tpu.memory_space<vmem>>, vector<16x3xf32>,
    return
  }
  func.func @transform_0(%arg0: i32) -> (i32, i32) {
    %c0_i32 = arith.constant 0 : i32
    %c0_i32_0 = arith.constant 0 : i32
    return %arg0, %c0_i32 : i32, i32
  }
  func.func @transform_1(%arg0: i32) -> (i32, i32) {
    %c0_i32 = arith.constant 0 : i32
    %c0_i32_0 = arith.constant 0 : i32
    %c0_i32_1 = arith.constant 0 : i32
    return %c0_i32, %c0_i32_0 : i32, i32
  }
  func.func @transform_2(%arg0: i32) -> (i32, i32) {
    %c0_i32 = arith.constant 0 : i32
    %c0_i32_0 = arith.constant 0 : i32
    %c0_i32_1 = arith.constant 0 : i32
    return %c0_i32, %c0_i32_0 : i32, i32
  }
  func.func @transform_3(%arg0: i32) -> (i32, i32) {
    %c0_i32 = arith.constant 0 : i32
    %c0_i32_0 = arith.constant 0 : i32
    %c0_i32_1 = arith.constant 0 : i32
    return %c0_i32, %c0_i32_0 : i32, i32
  }
  func.func @transform_4(%arg0: i32) -> (i32, i32) {
    %c0_i32 = arith.constant 0 : i32
    %c0_i32_0 = arith.constant 0 : i32
    %c0_i32_1 = arith.constant 0 : i32
    return %c0_i32, %c0_i32_0 : i32, i32
  }
  func.func @transform_5(%arg0: i32) -> (i32, i32) {
    %c0_i32 = arith.constant 0 : i32
    %c0_i32_0 = arith.constant 0 : i32
    %c0_i32_1 = arith.constant 0 : i32
    return %c0_i32, %c0_i32_0 : i32, i32
  }
  func.func @transform_6(%arg0: i32) -> (i32, i32) {
    %c0_i32 = arith.constant 0 : i32
    %c0_i32_0 = arith.constant 0 : i32
    %c0_i32_1 = arith.constant 0 : i32
    return %c0_i32, %c0_i32_0 : i32, i32
  }
  func.func @transform_7(%arg0: i32) -> (i32, i32) {
    %c0_i32 = arith.constant 0 : i32
    %c0_i32_0 = arith.constant 0 : i32
    return %arg0, %c0_i32 : i32, i32
  }
}

</mosaic_0001>

<llo_original>
// kernel: tpu_custom_call.1
$region0: #{tpu_custom_call.1}
  #allocation0 [shape = 'u32[]', space=smem, size = 0x4, offset = 0x4, fixed_abs, tag = 'smem constant byte address 0x4 - core index']
  #allocation1 [shape = 'u32[144,128]{1,0:T(1,128)}', space=vmem, size = 0x12000, scoped, tag = 'internal scratch']
  %s0 = inlined_call_operand.vmem [shape: bf16[16,64], index: 0, kind: input, shape index: {}]
  %s1 = inlined_call_operand.vmem [shape: bf16[64,32], index: 1, kind: input, shape index: {}]
  %s2 = inlined_call_operand.vmem [shape: f32[1,32], index: 2, kind: input, shape index: {}]
  %s3 = inlined_call_operand.vmem [shape: bf16[32,16], index: 3, kind: input, shape index: {}]
  %s4 = inlined_call_operand.vmem [shape: f32[1,16], index: 4, kind: input, shape index: {}]
  %s5 = inlined_call_operand.vmem [shape: bf16[16,3], index: 5, kind: input, shape index: {}]
  %s6 = inlined_call_operand.vmem [shape: f32[1,3], index: 6, kind: input, shape index: {}]
  %s7 = inlined_call_operand.vmem [shape: f32[16,3], index: 7, kind: output, shape index: {}]
  %s8 = sld [smem:[#allocation0]]
  $region38: #{tpu_custom_call.1} parent=0
    _
  %s10 = ssub.s32 1, %s8
  %s11 = scalar_select 0, %s10, %s8
  // Predicated region
  $region2: #{tpu_custom_call.1} parent=0 // pred_check
    _
  $region3: #{tpu_custom_call.1} parent=0 // pred_check_branch
    %13 = sbr.rel (0) target = $region5
  $region4: #{tpu_custom_call.1} parent=0 // pred_region
    _
  $region5: #{tpu_custom_call.1} parent=0 // pred_fallthru
    _
  // Predicated region
  $region6: #{tpu_custom_call.1} parent=0 // pred_check
    _
  $region7: #{tpu_custom_call.1} parent=0 // pred_check_branch
    %15 = sbr.rel (0) target = $region9
  $region8: #{tpu_custom_call.1} parent=0 // pred_region
    _
  $region9: #{tpu_custom_call.1} parent=0 // pred_fallthru
    _
  // Predicated region
  $region10: #{tpu_custom_call.1} parent=0 // pred_check
    _
  $region11: #{tpu_custom_call.1} parent=0 // pred_check_branch
    %17 = sbr.rel (0) target = $region13
  $region12: #{tpu_custom_call.1} parent=0 // pred_region
    _
  $region13: #{tpu_custom_call.1} parent=0 // pred_fallthru
    _
  // Predicated region
  $region14: #{tpu_custom_call.1} parent=0 // pred_check
    _
  $region15: #{tpu_custom_call.1} parent=0 // pred_check_branch
    %19 = sbr.rel (0) target = $region17
  $region16: #{tpu_custom_call.1} parent=0 // pred_region
    _
  $region17: #{tpu_custom_call.1} parent=0 // pred_fallthru
    _
  // Predicated region
  $region18: #{tpu_custom_call.1} parent=0 // pred_check
    _
  $region19: #{tpu_custom_call.1} parent=0 // pred_check_branch
    %21 = sbr.rel (0) target = $region21
  $region20: #{tpu_custom_call.1} parent=0 // pred_region
    _
  $region21: #{tpu_custom_call.1} parent=0 // pred_fallthru
    _
  // Predicated region
  $region22: #{tpu_custom_call.1} parent=0 // pred_check
    _
  $region23: #{tpu_custom_call.1} parent=0 // pred_check_branch
    %23 = sbr.rel (0) target = $region25
  $region24: #{tpu_custom_call.1} parent=0 // pred_region
    _
  $region25: #{tpu_custom_call.1} parent=0 // pred_fallthru
    _
  // Predicated region
  $region26: #{tpu_custom_call.1} parent=0 // pred_check
    _
  $region27: #{tpu_custom_call.1} parent=0 // pred_check_branch
    %25 = sbr.rel (0) target = $region29
  $region28: #{tpu_custom_call.1} parent=0 // pred_region
    _
  $region29: #{tpu_custom_call.1} parent=0 // pred_fallthru
    _
  %v27 = vld [vmem:[%s0] sm:$0xf]
  %v28 = vld [vmem:[%s0 + $0x4] sm:$0xf]
  %v29 = vld [vmem:[%s1] sm:$0xf]
  %v30 = vld [vmem:[%s1 + $0x4] sm:$0xf]
  %v31 = vld [vmem:[%s1 + $0x8] sm:$0xf]
  %v32 = vld [vmem:[%s1 + $0xc] sm:$0xf]
  %v33 = vld [vmem:[%s1 + $0x10] sm:$0xf]
  %v34 = vld [vmem:[%s1 + $0x14] sm:$0xf]
  %v35 = vld [vmem:[%s1 + $0x18] sm:$0xf]
  %v36 = vld [vmem:[%s1 + $0x1c] sm:$0xf]
  %v37 = vld [vmem:[%s2] sm:$0x1]
  %v39 = vlaneseq
  %v40 = vshrl.u32 %v39, 7
  %v41 = vsub.s32 0, %v40
  %v42 = vrot.slane %v37, %v41
  %v46 = vunpack.c.l.b16 %v27
  %v47 = vunpack.c.l.b16 %v28
  %v48 = vpack.c.b16 %v47, %v46
  %v57 = vunpack.c.l.b16 %v29
  %v58 = vunpack.c.l.b16 %v30
  %v59 = vunpack.c.l.b16 %v31
  %v60 = vunpack.c.l.b16 %v32
  %v61 = vunpack.c.l.b16 %v33
  %v62 = vunpack.c.l.b16 %v34
  %v63 = vunpack.c.l.b16 %v35
  %v64 = vunpack.c.l.b16 %v36
  %v65 = vpack.c.b16 %v58, %v57
  %v66 = vpack.c.b16 %v60, %v59
  %v67 = vpack.c.b16 %v62, %v61
  %v68 = vpack.c.b16 %v64, %v63
  %vm73 = vcmask 523264
  %v75 = vsel %vm73, %v48, 0
  %77 = vmatprep.subr.bf16.mxu0 0
  %78 = vmatpush1.bf16.msra.mxu0 %v65
  %79 = vmatprep.subr.bf16.mxu0 0
  %80 = vmatpush1.bf16.msra.mxu0 %v66
  %81 = vmatprep.subr.bf16.mxu0 0
  %82 = vmatpush1.bf16.msra.mxu0 %v67
  %83 = vmatprep.subr.bf16.mxu0 0
  %84 = vmatpush1.bf16.msra.mxu0 %v68
  %85 = vmatprep.subr.bf16.mxu0 0
  %86 = vmatpush1.bf16.msra.mxu0 0
  %87 = vmatprep.subr.bf16.mxu0 0
  %88 = vmatpush1.bf16.msra.mxu0 0
  %89 = vmatprep.subr.bf16.mxu0 0
  %90 = vmatpush1.bf16.msra.mxu0 0
  %91 = vmatprep.subr.bf16.mxu0 0
  %92 = vmatpush1.bf16.msra.mxu0 0
  %93 = vmatprep.subr.bf16.mxu0 0
  %94 = vmatpush1.bf16.msra.mxu0 0
  %95 = vmatprep.subr.bf16.mxu0 0
  %96 = vmatpush1.bf16.msra.mxu0 0
  %97 = vmatprep.subr.bf16.mxu0 0
  %98 = vmatpush1.bf16.msra.mxu0 0
  %99 = vmatprep.subr.bf16.mxu0 0
  %100 = vmatpush1.bf16.msra.mxu0 0
  %101 = vmatprep.subr.bf16.mxu0 0
  %102 = vmatpush1.bf16.msra.mxu0 0
  %103 = vmatprep.subr.bf16.mxu0 0
  %104 = vmatpush1.bf16.msra.mxu0 0
  %105 = vmatprep.subr.bf16.mxu0 0
  %106 = vmatpush1.bf16.msra.mxu0 0
  %107 = vmatprep.subr.bf16.mxu0 0
  %108 = vmatpush1.bf16.msra.mxu0 0
  %109 = vmatprep.mubr.bf16.mxu0 0
  %110 = vmatmul.mubr.bf16.gmra.mrb[0].mxu0 %v75
  %v111 = vpop.f32.mrb[0].mxu0
  %v112 = vadd.f32 %v42, %v111
  %v113 = vpop.f32.mrb[0].mxu0
  %v114 = vpop.f32.mrb[0].mxu0
  %v115 = vadd.f32 %v42, %v114
  %v116 = vpop.f32.mrb[0].mxu0
  %117 = vdwg.mxu0
  %v118 = vmax.f32 %v112, 0.0
  %v119 = vmax.f32 %v115, 0.0
  %v120 = vpack.c.bf16 %v119, %v118
  %v121 = vld [vmem:[%s3] sm:$0xf]
  %v122 = vld [vmem:[%s3 + $0x4] sm:$0xf]
  %v123 = vld [vmem:[%s3 + $0x8] sm:$0xf]
  %v124 = vld [vmem:[%s3 + $0xc] sm:$0xf]
  %v125 = vld [vmem:[%s4] sm:$0x1]
  %v127 = vlaneseq
  %v128 = vshrl.u32 %v127, 7
  %v129 = vsub.s32 0, %v128
  %v130 = vrot.slane %v125, %v129
  %v136 = vunpack.c.l.b16 %v121
  %v137 = vunpack.c.l.b16 %v122
  %v138 = vunpack.c.l.b16 %v123
  %v139 = vunpack.c.l.b16 %v124
  %v140 = vpack.c.b16 %v137, %v136
  %v141 = vpack.c.b16 %v139, %v138
  %vm144 = vcmask 261120
  %v146 = vsel %vm144, %v120, 0
  %148 = vmatprep.subr.bf16.mxu0 0
  %149 = vmatpush1.bf16.msra.mxu0 %v140
  %150 = vmatprep.subr.bf16.mxu0 0
  %151 = vmatpush1.bf16.msra.mxu0 %v141
  %152 = vmatprep.subr.bf16.mxu0 0
  %153 = vmatpush1.bf16.msra.mxu0 0
  %154 = vmatprep.subr.bf16.mxu0 0
  %155 = vmatpush1.bf16.msra.mxu0 0
  %156 = vmatprep.subr.bf16.mxu0 0
  %157 = vmatpush1.bf16.msra.mxu0 0
  %158 = vmatprep.subr.bf16.mxu0 0
  %159 = vmatpush1.bf16.msra.mxu0 0
  %160 = vmatprep.subr.bf16.mxu0 0
  %161 = vmatpush1.bf16.msra.mxu0 0
  %162 = vmatprep.subr.bf16.mxu0 0
  %163 = vmatpush1.bf16.msra.mxu0 0
  %164 = vmatprep.subr.bf16.mxu0 0
  %165 = vmatpush1.bf16.msra.mxu0 0
  %166 = vmatprep.subr.bf16.mxu0 0
  %167 = vmatpush1.bf16.msra.mxu0 0
  %168 = vmatprep.subr.bf16.mxu0 0
  %169 = vmatpush1.bf16.msra.mxu0 0
  %170 = vmatprep.subr.bf16.mxu0 0
  %171 = vmatpush1.bf16.msra.mxu0 0
  %172 = vmatprep.subr.bf16.mxu0 0
  %173 = vmatpush1.bf16.msra.mxu0 0
  %174 = vmatprep.subr.bf16.mxu0 0
  %175 = vmatpush1.bf16.msra.mxu0 0
  %176 = vmatprep.subr.bf16.mxu0 0
  %177 = vmatpush1.bf16.msra.mxu0 0
  %178 = vmatprep.subr.bf16.mxu0 0
  %179 = vmatpush1.bf16.msra.mxu0 0
  %180 = vmatprep.mubr.bf16.mxu0 0
  %181 = vmatmul.mubr.bf16.gmra.mrb[0].mxu0 %v146
  %v182 = vpop.f32.mrb[0].mxu0
  %v183 = vadd.f32 %v130, %v182
  %v184 = vpop.f32.mrb[0].mxu0
  %v185 = vpop.f32.mrb[0].mxu0
  %v186 = vadd.f32 %v130, %v185
  %v187 = vpop.f32.mrb[0].mxu0
  %188 = vdwg.mxu0
  %v189 = vmax.f32 %v183, 0.0
  %v190 = vmax.f32 %v186, 0.0
  %v191 = vpack.c.bf16 %v190, %v189
  %v192 = vld [vmem:[%s5] sm:$0xf]
  %v193 = vld [vmem:[%s5 + $0x4] sm:$0xf]
  %v194 = vld [vmem:[%s6] sm:$0x1]
  %v196 = vlaneseq
  %v197 = vshrl.u32 %v196, 7
  %v198 = vsub.s32 0, %v197
  %v199 = vrot.slane %v194, %v198
  %v203 = vunpack.c.l.b16 %v192
  %v204 = vunpack.c.l.b16 %v193
  %v205 = vpack.c.b16 %v204, %v203
  %vm207 = vcmask 130048
  %v209 = vsel %vm207, %v191, 0
  %211 = vmatprep.subr.bf16.mxu0 0
  %212 = vmatpush1.bf16.msra.mxu0 %v205
  %213 = vmatprep.subr.bf16.mxu0 0
  %214 = vmatpush1.bf16.msra.mxu0 0
  %215 = vmatprep.subr.bf16.mxu0 0
  %216 = vmatpush1.bf16.msra.mxu0 0
  %217 = vmatprep.subr.bf16.mxu0 0
  %218 = vmatpush1.bf16.msra.mxu0 0
  %219 = vmatprep.subr.bf16.mxu0 0
  %220 = vmatpush1.bf16.msra.mxu0 0
  %221 = vmatprep.subr.bf16.mxu0 0
  %222 = vmatpush1.bf16.msra.mxu0 0
  %223 = vmatprep.subr.bf16.mxu0 0
  %224 = vmatpush1.bf16.msra.mxu0 0
  %225 = vmatprep.subr.bf16.mxu0 0
  %226 = vmatpush1.bf16.msra.mxu0 0
  %227 = vmatprep.subr.bf16.mxu0 0
  %228 = vmatpush1.bf16.msra.mxu0 0
  %229 = vmatprep.subr.bf16.mxu0 0
  %230 = vmatpush1.bf16.msra.mxu0 0
  %231 = vmatprep.subr.bf16.mxu0 0
  %232 = vmatpush1.bf16.msra.mxu0 0
  %233 = vmatprep.subr.bf16.mxu0 0
  %234 = vmatpush1.bf16.msra.mxu0 0
  %235 = vmatprep.subr.bf16.mxu0 0
  %236 = vmatpush1.bf16.msra.mxu0 0
  %237 = vmatprep.subr.bf16.mxu0 0
  %238 = vmatpush1.bf16.msra.mxu0 0
  %239 = vmatprep.subr.bf16.mxu0 0
  %240 = vmatpush1.bf16.msra.mxu0 0
  %241 = vmatprep.subr.bf16.mxu0 0
  %242 = vmatpush1.bf16.msra.mxu0 0
  %243 = vmatprep.mubr.bf16.mxu0 0
  %244 = vmatmul.mubr.bf16.gmra.mrb[0].mxu0 %v209
  %v245 = vpop.f32.mrb[0].mxu0
  %v246 = vadd.f32 %v199, %v245
  %v247 = vpop.f32.mrb[0].mxu0
  %v248 = vpop.f32.mrb[0].mxu0
  %v249 = vadd.f32 %v199, %v248
  %v250 = vpop.f32.mrb[0].mxu0
  %251 = vdwg.mxu0
  %vm252 = vcmask 23552
  %253 = vst.msk [vmem:[%s7] sm:$0xff] %vm252, %v246
  %254 = vst.msk [vmem:[%s7 + $0x8] sm:$0xff] %vm252, %v249
  // Predicated region
  $region30: #{tpu_custom_call.1} parent=0 // pred_check
    _
  $region31: #{tpu_custom_call.1} parent=0 // pred_check_branch
    %256 = sbr.rel (0) target = $region33
  $region32: #{tpu_custom_call.1} parent=0 // pred_region
    _
  $region33: #{tpu_custom_call.1} parent=0 // pred_fallthru
    _
  // Predicated region
  $region34: #{tpu_custom_call.1} parent=0 // pred_check
    _
  $region35: #{tpu_custom_call.1} parent=0 // pred_check_branch
    %258 = sbr.rel (0) target = $region37
  $region36: #{tpu_custom_call.1} parent=0 // pred_region
    _
  $region37: #{tpu_custom_call.1} parent=0 // pred_fallthru
    _

</llo_original>
